<compile_context>
chip_gen: v7x
topology: tpu7x:2x2x1
jax: 0.10.0
libtpu: 0.0.40
codegen_flags: <defaults>
</compile_context>

<pallas_src>
import jax
import jax.numpy as jnp
from jax.experimental import pallas as pl
from jax.experimental.pallas import tpu as pltpu


def _sched_linear_kernel(idx_ref, x_ref, wt_ref, b_ref, o_ref):
    """One grid step: one schedule entry x one row tile.

    idx_ref: SMEM (m,) int32   -- scalar-prefetched schedule (used by index_maps)
    x_ref:   VMEM (TN, D)      -- this entry's row tile (bf16)
    wt_ref:  VMEM (D, D)       -- W^T for this entry ((in, out) layout, bf16)
    b_ref:   VMEM (1, D)       -- bias for this entry (f32)
    o_ref:   VMEM (TN, D)      -- output tile (f32)
    """
    del idx_ref  # only consumed by the BlockSpec index_maps
    y = jnp.dot(x_ref[...], wt_ref[...], preferred_element_type=jnp.float32)
    o_ref[...] = (y + b_ref[...]).astype(o_ref.dtype)


def _round_up(a, b):
    return (a + b - 1) // b * b


def apply_transformations(x_stacked, weights_all, biases_all, idx,
                          *, tile_n=256, compute_dtype=jnp.bfloat16):
    """x_stacked: (m, N, D) f32; weights_all: (n_patches, D, D) (out, in) layout;
    biases_all: (n_patches, D); idx: (m,) int32 schedule.  Returns (m, N, D)."""
    m, N, D = x_stacked.shape
    n_patches = weights_all.shape[0]
    out_dtype = x_stacked.dtype

    # One-time wrapper-side prep (layout plumbing, not per-step work).
    wt_all = jnp.transpose(weights_all, (0, 2, 1)).astype(compute_dtype)
    b3 = biases_all.astype(jnp.float32)[:, None, :]          # (n_patches, 1, D)
    x = x_stacked.astype(compute_dtype)

    # Row (N) tiling: sublane-aligned tile; pad N up to a multiple of the tile.
    TN = min(_round_up(tile_n, 8), _round_up(N, 8))
    N_pad = _round_up(N, TN)
    if N_pad != N:
        x = jnp.pad(x, ((0, 0), (0, N_pad - N), (0, 0)))
    n_tiles = N_pad // TN

    # VMEM budget: double-buffered x / weight / bias / out blocks + headroom,
    # clamped to the v7x 64 MiB physical VMEM.
    cb = jnp.dtype(compute_dtype).itemsize
    ob = jnp.dtype(out_dtype).itemsize
    block_bytes = (2 * TN * D * cb        # x tile (double buffered)
                   + 2 * D * D * cb       # gathered W^T block
                   + 2 * 1 * D * 4        # gathered bias block
                   + 2 * TN * D * ob)     # out tile
    vmem_limit = int(min(max(2 * block_bytes + (4 << 20), 16 << 20), 64 << 20))

    out = pl.pallas_call(
        _sched_linear_kernel,
        out_shape=jax.ShapeDtypeStruct((m, N_pad, D), out_dtype),
        grid_spec=pltpu.PrefetchScalarGridSpec(
            num_scalar_prefetch=1,               # idx -> SMEM, fed to index_maps
            grid=(m, n_tiles),                   # entry outer, row tile inner
            in_specs=[
                # This entry's row tile.
                pl.BlockSpec((None, TN, D), lambda i, j, sched: (i, j, 0)),
                # Per-entry weight gather driven by the prefetched schedule.
                pl.BlockSpec((None, D, D), lambda i, j, sched: (sched[i], 0, 0)),
                # Per-entry bias gather (kept f32).
                pl.BlockSpec((None, 1, D), lambda i, j, sched: (sched[i], 0, 0)),
            ],
            out_specs=pl.BlockSpec((None, TN, D), lambda i, j, sched: (i, j, 0)),
        ),
        compiler_params=pltpu.CompilerParams(
            dimension_semantics=("parallel", "parallel"),
            vmem_limit_bytes=vmem_limit),
    )(idx, x, wt_all, b3)

    if N_pad != N:
        out = out[:, :N, :]
    return out


def make_orthogonal_weights(key, n_patches, dim):
    """Deterministic stand-in for geotorch.orthogonal: QR of gaussian mats."""
    keys = jax.random.split(key, n_patches)
    ws = []
    for k in keys:
        a = jax.random.normal(k, (dim, dim), dtype=jnp.float32)
        q, r = jnp.linalg.qr(a)
        d = jnp.diag(r)
        q = q * jnp.where(d >= 0, 1.0, -1.0)[None, :]   # sign fix
        ws.append(q)
    return jnp.stack(ws, axis=0)  # (n_patches, dim, dim), PyTorch (out, in)


def transformation_schedule(n_patches):
    # [T0] + [Ti, Ti for i in 1..n_patches-2] + [T_{n-1}]
    sched = [0]
    for i in range(1, n_patches - 1):
        sched.extend([i, i])
    sched.append(n_patches - 1)
    # Wrapper-side bounds guard (VMEM refs have no runtime OOB check).
    assert all(0 <= s < n_patches for s in sched)
    return jnp.asarray(sched, dtype=jnp.int32)


def model_forward(patch_emb_list, weights_all, biases_all, *, tile_n=256):
    """patch_emb_list: list of m arrays (N, D); returns list of m arrays (N, D)."""
    m = len(patch_emb_list)
    if m == 0:
        return []
    n_patches = weights_all.shape[0]
    idx = transformation_schedule(n_patches)
    assert m == int(idx.shape[0]), "len(patch_emb) must match the schedule length"
    x_stacked = jnp.stack(patch_emb_list, axis=0)          # (m, N, D)
    out = apply_transformations(x_stacked, weights_all, biases_all, idx,
                                tile_n=tile_n)
    return [out[i] for i in range(m)]


if __name__ == "__main__":
    n_patches = 4
    dim = 256           # multiple of 256 -> fully fed v6e/v7x MXU
    n_nodes = 512
    m = 2 * n_patches - 2   # 6 patches in the forward schedule

    key = jax.random.PRNGKey(0)
    k_w, k_b, k_x = jax.random.split(key, 3)

    weights_all = make_orthogonal_weights(k_w, n_patches, dim)   # (n_patches, D, D)
    biases_all = jax.random.normal(k_b, (n_patches, dim), jnp.float32) * 0.01

    x_keys = jax.random.split(k_x, m)
    patch_emb = [jax.random.normal(k, (n_nodes, dim), jnp.float32) for k in x_keys]

    out_list = model_forward(patch_emb, weights_all, biases_all, tile_n=256)
    out_list = [jax.block_until_ready(o) for o in out_list]

    # Reference check in plain JAX with the same bf16 operand rounding the
    # kernel uses (f32 accumulation in both cases).
    idx = transformation_schedule(n_patches)
    w_q = weights_all.astype(jnp.bfloat16).astype(jnp.float32)
    ok = True
    for i in range(m):
        x_q = patch_emb[i].astype(jnp.bfloat16).astype(jnp.float32)
        ref = x_q @ w_q[idx[i]].T + biases_all[idx[i]]
        ok = ok and bool(jnp.allclose(out_list[i], ref, atol=2e-2, rtol=2e-2))
        ok = ok and out_list[i].shape == (n_nodes, dim)

    if ok:
        print("KERNEL_OK")
    else:
        print("MISMATCH")
</pallas_src>

<mosaic_0001>
module attributes {stable_mosaic.version = 11 : i64} {
  func.func @_sched_linear_kernel(%arg0: i32, %arg1: i32, %arg2: memref<6xi32, #tpu.memory_space<smem>>, %arg3: memref<1x256x256xbf16, #tpu.memory_space<vmem>>, %arg4: memref<1x256x256xbf16, #tpu.memory_space<vmem>>, %arg5: memref<1x1x256xf32, #tpu.memory_space<vmem>>, %arg6: memref<1x256x256xf32, #tpu.memory_space<vmem>>) attributes {dimension_semantics = [#tpu.dimension_semantics<parallel>, #tpu.dimension_semantics<parallel>], iteration_bounds = array<i64: 6, 2>, scalar_prefetch = 1 : i64, scratch_operands = 0 : i64, tpu.core_type = #tpu.core_type<tc>, window_params = [{transform_indices = @transform_0, window_bounds = array<i64: 1, 256, 256>}, {transform_indices = @transform_1, window_bounds = array<i64: 1, 256, 256>}, {transform_indices = @transform_2, window_bounds = array<i64: 1, 1, 256>}, {transform_indices = @transform_3, window_bounds = array<i64: 1, 256, 256>}]} {
    %c0 = arith.constant 0 : index
    %c0_0 = arith.constant 0 : index
    %c0_1 = arith.constant 0 : index
    %0 = vector.load %arg3[%c0, %c0_0, %c0_1] : memref<1x256x256xbf16, #tpu.memory_space<vmem>>, vector<1x256x256xbf16>
    %1 = vector.shape_cast %0 : vector<1x256x256xbf16> to vector<256x256xbf16>
    %c0_2 = arith.constant 0 : index
    %c0_3 = arith.constant 0 : index
    %c0_4 = arith.constant 0 : index
    %2 = vector.load %arg4[%c0_2, %c0_3, %c0_4] : memref<1x256x256xbf16, #tpu.memory_space<vmem>>, vector<1x256x256xbf16>
    %3 = vector.shape_cast %2 : vector<1x256x256xbf16> to vector<256x256xbf16>
    %cst = arith.constant dense<0.000000e+00> : vector<256x256xf32>
    %4 = tpu.matmul %1, %3, %cst {dimension_numbers = #tpu.dot_dimension_numbers<[1], [0], [0], [1], [0, 0, 1, 1], [], []>} : vector<256x256xbf16>, vector<256x256xbf16>, vector<256x256xf32> -> vector<256x256xf32>
    %c0_5 = arith.constant 0 : index
    %c0_6 = arith.constant 0 : index
    %c0_7 = arith.constant 0 : index
    %5 = vector.load %arg5[%c0_5, %c0_6, %c0_7] : memref<1x1x256xf32, #tpu.memory_space<vmem>>, vector<1x1x256xf32>
    %6 = vector.shape_cast %5 : vector<1x1x256xf32> to vector<1x256xf32>
    %7 = vector.broadcast %6 : vector<1x256xf32> to vector<256x256xf32>
    %8 = arith.addf %4, %7 : vector<256x256xf32>
    %c0_8 = arith.constant 0 : index
    %c0_9 = arith.constant 0 : index
    %c0_10 = arith.constant 0 : index
    %9 = vector.load %arg6[%c0_8, %c0_9, %c0_10] : memref<1x256x256xf32, #tpu.memory_space<vmem>>, vector<1x256x256xf32>
    %10 = vector.shape_cast %9 : vector<1x256x256xf32> to vector<256x256xf32>
    %11 = vector.shape_cast %8 : vector<256x256xf32> to vector<1x256x256xf32>
    tpu.vector_store %arg6[%c0_8, %c0_9, %c0_10], %11 {strides = array<i32>} : memref<1x256x256xf32, #tpu.memory_space<vmem>>, vector<1x256x256xf32>,
    return
  }
  func.func @transform_0(%arg0: i32, %arg1: i32, %arg2: memref<6xi32, #tpu.memory_space<smem>>) -> (i32, i32, i32) {
    %c0_i32 = arith.constant 0 : i32
    %c0_i32_0 = arith.constant 0 : i32
    return %arg0, %arg1, %c0_i32 : i32, i32, i32
  }
  func.func @transform_1(%arg0: i32, %arg1: i32, %arg2: memref<6xi32, #tpu.memory_space<smem>>) -> (i32, i32, i32) {
    %0 = arith.index_cast %arg0 : i32 to index
    %1 = memref.load %arg2[%0] : memref<6xi32, #tpu.memory_space<smem>>
    %c0_i32 = arith.constant 0 : i32
    %c0_i32_0 = arith.constant 0 : i32
    %c0_i32_1 = arith.constant 0 : i32
    return %1, %c0_i32, %c0_i32_0 : i32, i32, i32
  }
  func.func @transform_2(%arg0: i32, %arg1: i32, %arg2: memref<6xi32, #tpu.memory_space<smem>>) -> (i32, i32, i32) {
    %0 = arith.index_cast %arg0 : i32 to index
    %1 = memref.load %arg2[%0] : memref<6xi32, #tpu.memory_space<smem>>
    %c0_i32 = arith.constant 0 : i32
    %c0_i32_0 = arith.constant 0 : i32
    %c0_i32_1 = arith.constant 0 : i32
    return %1, %c0_i32, %c0_i32_0 : i32, i32, i32
  }
  func.func @transform_3(%arg0: i32, %arg1: i32, %arg2: memref<6xi32, #tpu.memory_space<smem>>) -> (i32, i32, i32) {
    %c0_i32 = arith.constant 0 : i32
    %c0_i32_0 = arith.constant 0 : i32
    return %arg0, %arg1, %c0_i32 : i32, i32, i32
  }
}

</mosaic_0001>

<llo_original>
// kernel: tpu_custom_call.1
$region0: #{tpu_custom_call.1}
  #allocation0 [shape = 'u32[]', space=smem, size = 0x4, offset = 0x4, fixed_abs, tag = 'smem constant byte address 0x4 - core index']
  #allocation1 [shape = 'u32[144,128]{1,0:T(1,128)}', space=vmem, size = 0x12000, scoped, tag = 'internal scratch']
  #allocation2 [shape = 's32[1]{0}', space=sflag, size = 0x4, scoped, tag = 'scoped memory for tpu_custom_call.1']
  #allocation3 [shape = 'u8[512]{0}', space=smem, size = 0x200, scoped, tag = 'prefetched SMEM operand 0']
  %s0 = inlined_call_operand.hbm [shape: s32[6], index: 0, kind: input, shape index: {}]
  %s1 = inlined_call_operand.hbm [shape: bf16[6,512,256], index: 1, kind: input, shape index: {}]
  %s2 = inlined_call_operand.hbm [shape: bf16[4,256,256], index: 2, kind: input, shape index: {}]
  %s3 = inlined_call_operand.hbm [shape: f32[4,1,256], index: 3, kind: input, shape index: {}]
  %s4 = inlined_call_operand.hbm [shape: f32[6,512,256], index: 4, kind: output, shape index: {}]
  %s5 = sld [smem:[#allocation0]]
  $region57: #{tpu_custom_call.1} parent=0
    _
  %s7 = ssub.s32 1, %s5
  %s8 = scalar_select 0, %s7, %s5
  %10 = dma.hbm_to_smem %s0, 16, [#allocation3], [#allocation2]
  %11 = dma.done [#allocation2], 16
  %12 = sfence
  $region1: #{tpu_custom_call.1} parent=0
    #allocation4 [shape = 'u8[262144]{0}', space=vmem, size = 0x40000, scoped, tag = 'input window, operand 1']
    #allocation5 [shape = 's32[2]{0}', space=sflag, size = 0x8, scoped, tag = 'scoped memory for tpu_custom_call.1']
    #allocation6 [shape = 's32[2]{0}', space=sflag, size = 0x8, scoped, tag = 'scoped memory for tpu_custom_call.1']
    #allocation7 [shape = 'u8[262144]{0}', space=vmem, size = 0x40000, scoped, tag = 'input window, operand 2']
    #allocation8 [shape = 's32[2]{0}', space=sflag, size = 0x8, scoped, tag = 'scoped memory for tpu_custom_call.1']
    #allocation9 [shape = 'u8[2048]{0}', space=vmem, size = 0x800, scoped, tag = 'input window, operand 3']
    #allocation10 [shape = 'u8[524288]{0}', space=vmem, size = 0x80000, scoped, tag = 'output window, operand 0']
    %13 = vsyncpa [#allocation5], 0
    %s14 = scalar_lea.sflag [#allocation5], 1
    %15 = vsyncpa %s14, 0
    %16 = vsyncpa [#allocation8], 0
    %s17 = scalar_lea.sflag [#allocation8], 1
    %18 = vsyncpa %s17, 0
    %19 = vsyncpa [#allocation6], 0
    %s20 = scalar_lea.sflag [#allocation6], 1
    %21 = vsyncpa %s20, 0
    loop: start=0, step=1, limit=14
    $region2: #{tpu_custom_call.1} parent=1 // loop_pre_header
      _
    $region3: #{tpu_custom_call.1} parent=1 // loop_header
      %s23 = sphi 0, %s27
      %p24 = scmp.ge.s32.totalorder %s23, 14
      %s30 = sphi 0, %s42
      %s31 = sphi 0, %s38
      %s32 = sphi 0, %s30
      %s33 = sphi 0, %s31
      %s34 = sphi 0, %s32
      %s35 = sphi 0, %s33
      %s47 = sphi 0, %s49
      %s50 = sphi 0, %s47
      %s51 = sphi 0, %s50
      %s67 = sphi 0, %s51
      %s75 = sphi 0, %s77
      %s78 = sphi 0, %s75
      %s79 = sphi 0, %s78
      %s95 = sphi 0, %s79
      %s103 = sphi 0, %s105
      %s106 = sphi 0, %s103
      %s107 = sphi 0, %s106
      %s123 = sphi 0, %s107
      %s131 = sphi 0, %s133
      %s134 = sphi 0, %s131
      %s135 = sphi 0, %s134
      %s151 = sphi 0, %s135
    $region4: #{tpu_custom_call.1} parent=1 // loop_header_branch
      %26 = sbr.rel (%p24) target = $region8
    $region5: #{tpu_custom_call.1} parent=1 // loop_body
      %s28 = ssub.s32 %s23, 1
      %s29 = ssub.s32 %s23, 2
      %s36 = sadd.s32 1, %s31
      %p37 = scmp.ge.s32.totalorder %s36, 2
      %s38 = scalar_select %p37, 0, %s36
      %s39 = sadd.s32 1, %s30
      %s40 = scalar_select %p37, %s39, %s30
      %p41 = scmp.ge.s32.totalorder %s40, 6
      %s42 = scalar_select %p41, 0, %s40
      %s43 = ssub.s32 %s30, %s42
      %s44 = ssub.s32 %s31, %s38
      %s45 = sor.u32 %s43, %s44
      %p46 = scmp.eq.s32.totalorder %s45, 0
      %s48 = sadd.s32 %s47, 1
      %s49 = scalar_select %p46, %s47, %s48
      %p52 = pneg %p46
      %p53 = scmp.eq.s32.totalorder %s23, 11
      %p54 = por %p52, %p53
      %p55 = scmp.ne.s32.totalorder %s47, %s50
      %p56 = scmp.eq.s32.totalorder %s23, 0
      %p57 = por %p55, %p56
      %p58 = scmp.ne.s32.totalorder %s47, %s50
      %p59 = scmp.eq.s32.totalorder %s28, 11
      %p60 = por %p58, %p59
      %p61 = scmp.ne.s32.totalorder %s50, %s51
      %p62 = scmp.eq.s32.totalorder %s28, 0
      %p63 = por %p61, %p62
      %p64 = scmp.ne.s32.totalorder %s50, %s51
      %p65 = scmp.eq.s32.totalorder %s29, 11
      %p66 = por %p64, %p65
      %p68 = scmp.ne.s32.totalorder %s51, %s67
      %p69 = scmp.eq.s32.totalorder %s29, 0
      %p70 = por %p68, %p69
      %s71 = sld [smem:[#allocation3 + %s30]]
      %s72 = sld [smem:[#allocation3 + %s42]]
      %s73 = ssub.s32 %s71, %s72
      %p74 = scmp.eq.s32.totalorder %s73, 0
      %s76 = sadd.s32 %s75, 1
      %s77 = scalar_select %p74, %s75, %s76
      %p80 = pneg %p74
      %p81 = scmp.eq.s32.totalorder %s23, 11
      %p82 = por %p80, %p81
      %p83 = scmp.ne.s32.totalorder %s75, %s78
      %p84 = scmp.eq.s32.totalorder %s23, 0
      %p85 = por %p83, %p84
      %p86 = scmp.ne.s32.totalorder %s75, %s78
      %p87 = scmp.eq.s32.totalorder %s28, 11
      %p88 = por %p86, %p87
      %p89 = scmp.ne.s32.totalorder %s78, %s79
      %p90 = scmp.eq.s32.totalorder %s28, 0
      %p91 = por %p89, %p90
      %p92 = scmp.ne.s32.totalorder %s78, %s79
      %p93 = scmp.eq.s32.totalorder %s29, 11
      %p94 = por %p92, %p93
      %p96 = scmp.ne.s32.totalorder %s79, %s95
      %p97 = scmp.eq.s32.totalorder %s29, 0
      %p98 = por %p96, %p97
      %s99 = sld [smem:[#allocation3 + %s30]]
      %s100 = sld [smem:[#allocation3 + %s42]]
      %s101 = ssub.s32 %s99, %s100
      %p102 = scmp.eq.s32.totalorder %s101, 0
      %s104 = sadd.s32 %s103, 1
      %s105 = scalar_select %p102, %s103, %s104
      %p108 = pneg %p102
      %p109 = scmp.eq.s32.totalorder %s23, 11
      %p110 = por %p108, %p109
      %p111 = scmp.ne.s32.totalorder %s103, %s106
      %p112 = scmp.eq.s32.totalorder %s23, 0
      %p113 = por %p111, %p112
      %p114 = scmp.ne.s32.totalorder %s103, %s106
      %p115 = scmp.eq.s32.totalorder %s28, 11
      %p116 = por %p114, %p115
      %p117 = scmp.ne.s32.totalorder %s106, %s107
      %p118 = scmp.eq.s32.totalorder %s28, 0
      %p119 = por %p117, %p118
      %p120 = scmp.ne.s32.totalorder %s106, %s107
      %p121 = scmp.eq.s32.totalorder %s29, 11
      %p122 = por %p120, %p121
      %p124 = scmp.ne.s32.totalorder %s107, %s123
      %p125 = scmp.eq.s32.totalorder %s29, 0
      %p126 = por %p124, %p125
      %s127 = ssub.s32 %s30, %s42
      %s128 = ssub.s32 %s31, %s38
      %s129 = sor.u32 %s127, %s128
      %p130 = scmp.eq.s32.totalorder %s129, 0
      %s132 = sadd.s32 %s131, 1
      %s133 = scalar_select %p130, %s131, %s132
      %p136 = pneg %p130
      %p137 = scmp.eq.s32.totalorder %s23, 11
      %p138 = por %p136, %p137
      %p139 = scmp.ne.s32.totalorder %s131, %s134
      %p140 = scmp.eq.s32.totalorder %s23, 0
      %p141 = por %p139, %p140
      %p142 = scmp.ne.s32.totalorder %s131, %s134
      %p143 = scmp.eq.s32.totalorder %s28, 11
      %p144 = por %p142, %p143
      %p145 = scmp.ne.s32.totalorder %s134, %s135
      %p146 = scmp.eq.s32.totalorder %s28, 0
      %p147 = por %p145, %p146
      %p148 = scmp.ne.s32.totalorder %s134, %s135
      %p149 = scmp.eq.s32.totalorder %s29, 11
      %p150 = por %p148, %p149
      %p152 = scmp.ne.s32.totalorder %s135, %s151
      %p153 = scmp.eq.s32.totalorder %s29, 0
      %p154 = por %p152, %p153
      %p155 = scmp.le.s32.totalorder 1, %s23
      %p156 = scmp.lt.s32.totalorder %s23, 13
      %p157 = pnand %p155, %p156
      %p158 = pneg %p157
      // Predicated region
      $region9: #{tpu_custom_call.1} parent=5 // pred_check
        _
      $region10: #{tpu_custom_call.1} parent=5 // pred_check_branch
        %160 = sbr.rel (%p157) target = $region12
      $region11: #{tpu_custom_call.1} parent=5 // pred_region
        %s161 = ssub.s32 %s23, 1
      $region12: #{tpu_custom_call.1} parent=5 // pred_fallthru
        _
      %p162 = scmp.lt.s32.totalorder %s23, 12
      // Predicated region
      $region13: #{tpu_custom_call.1} parent=5 // pred_check
        %p163 = pneg %p162
      $region14: #{tpu_custom_call.1} parent=5 // pred_check_branch
        %165 = sbr.rel (%p163) target = $region16
      $region15: #{tpu_custom_call.1} parent=5 // pred_region
        // Predicated region
        $region17: #{tpu_custom_call.1} parent=15 // pred_check
          %p166 = pneg %p57
        $region18: #{tpu_custom_call.1} parent=15 // pred_check_branch
          %168 = sbr.rel (%p166) target = $region20
        $region19: #{tpu_custom_call.1} parent=15 // pred_region
          %s169 = sand.u32 %s47, 1
          %s170 = scalar_lea.sflag [#allocation5], %s169
          %s171 = sand.u32 %s47, 1
          %s172 = smul.addr %s171, 256
          %s173 = scalar_lea.vmem [#allocation4], %s172
          %s174 = smul.u32 32, %s31
          %s176 = ssub.s32 4096, 4096
          %177 = vsyncadd %s170, %s176
          %s178 = smul.addr %s174, 2
          %s179 = smul.addr %s30, 128
          %s180 = sadd.s32 %s178, %s179
          %s181 = smul.addr %s180, 64
          %s182 = scalar_lea.hbm %s1, %s181
          %s183 = sshll.u32 %s173, 4
          %s184 = int_to_ptr.vmem [resolvable:$true] %s183
          %189 = dma.hbm_to_vmem [thread:$0]  %s182, 4096, %s184, %s170, 128, 128, 8
        $region20: #{tpu_custom_call.1} parent=15 // pred_fallthru
          _
        // Predicated region
        $region21: #{tpu_custom_call.1} parent=15 // pred_check
          %p190 = pneg %p85
        $region22: #{tpu_custom_call.1} parent=15 // pred_check_branch
          %192 = sbr.rel (%p190) target = $region24
        $region23: #{tpu_custom_call.1} parent=15 // pred_region
          %s193 = sand.u32 %s23, 1
          %s194 = scalar_lea.sflag [#allocation8], %s193
          %s195 = sand.u32 %s75, 1
          %s196 = smul.addr %s195, 256
          %s197 = scalar_lea.vmem [#allocation7], %s196
          %s198 = sld [smem:[#allocation3 + %s30]]
          %s200 = ssub.s32 4096, 4096
          %201 = vsyncadd %s194, %s200
          %s202 = smul.addr %s198, 64
          %s203 = smul.addr %s202, 64
          %s204 = scalar_lea.hbm %s2, %s203
          %s205 = sshll.u32 %s197, 4
          %s206 = int_to_ptr.vmem [resolvable:$true] %s205
          %211 = dma.hbm_to_vmem [thread:$0]  %s204, 4096, %s206, %s194, 128, 128, 8
        $region24: #{tpu_custom_call.1} parent=15 // pred_fallthru
          _
        // Predicated region
        $region25: #{tpu_custom_call.1} parent=15 // pred_check
          %p212 = pneg %p113
        $region26: #{tpu_custom_call.1} parent=15 // pred_check_branch
          %214 = sbr.rel (%p212) target = $region28
        $region27: #{tpu_custom_call.1} parent=15 // pred_region
          %s215 = sand.u32 %s23, 1
          %s216 = scalar_lea.sflag [#allocation8], %s215
          %s217 = sand.u32 %s103, 1
          %s218 = smul.addr %s217, 2
          %s219 = scalar_lea.vmem [#allocation9], %s218
          %s220 = sld [smem:[#allocation3 + %s30]]
          %s222 = ssub.s32 32, 32
          %223 = vsyncadd %s216, %s222
          %s224 = smul.addr %s220, 2
          %s225 = smul.addr %s224, 16
          %s226 = scalar_lea.hbm %s3, %s225
          %s228 = sshll.u32 %s219, 4
          %s229 = int_to_ptr.vmem [resolvable:$true] %s228
          %231 = dma.hbm_to_vmem [thread:$0]  %s226, 32, %s229, %s216
        $region28: #{tpu_custom_call.1} parent=15 // pred_fallthru
          _
      $region16: #{tpu_custom_call.1} parent=5 // pred_fallthru
        _
      %p232 = scmp.le.s32.totalorder 1, %s23
      %p233 = scmp.lt.s32.totalorder %s23, 13
      %p234 = pnand %p232, %p233
      %p235 = pneg %p234
      // Predicated region
      $region29: #{tpu_custom_call.1} parent=5 // pred_check
        _
      $region30: #{tpu_custom_call.1} parent=5 // pred_check_branch
        %237 = sbr.rel (%p234) target = $region32
      $region31: #{tpu_custom_call.1} parent=5 // pred_region
        %s238 = ssub.s32 %s23, 1
        %s239 = sand.u32 %s50, 1
        %s240 = scalar_lea.sflag [#allocation5], %s239
        %s241 = sand.u32 %s50, 1
        %s242 = smul.addr %s241, 256
        %s243 = scalar_lea.vmem [#allocation4], %s242
        // Predicated region
        $region33: #{tpu_custom_call.1} parent=31 // pred_check
          %p244 = pneg %p63
        $region34: #{tpu_custom_call.1} parent=31 // pred_check_branch
          %246 = sbr.rel (%p244) target = $region36
        $region35: #{tpu_custom_call.1} parent=31 // pred_region
          %247 = dma.done %s240, 4096
        $region36: #{tpu_custom_call.1} parent=31 // pred_fallthru
          _
        %s248 = sand.u32 %s28, 1
        %s249 = scalar_lea.sflag [#allocation8], %s248
        %s250 = sand.u32 %s78, 1
        %s251 = smul.addr %s250, 256
        %s252 = scalar_lea.vmem [#allocation7], %s251
        // Predicated region
        $region37: #{tpu_custom_call.1} parent=31 // pred_check
          %p253 = pneg %p91
        $region38: #{tpu_custom_call.1} parent=31 // pred_check_branch
          %255 = sbr.rel (%p253) target = $region40
        $region39: #{tpu_custom_call.1} parent=31 // pred_region
          %256 = dma.done %s249, 4096
        $region40: #{tpu_custom_call.1} parent=31 // pred_fallthru
          _
        %s257 = sand.u32 %s28, 1
        %s258 = scalar_lea.sflag [#allocation8], %s257
        %s259 = sand.u32 %s106, 1
        %s260 = smul.addr %s259, 2
        %s261 = scalar_lea.vmem [#allocation9], %s260
        // Predicated region
        $region41: #{tpu_custom_call.1} parent=31 // pred_check
          %p262 = pneg %p119
        $region42: #{tpu_custom_call.1} parent=31 // pred_check_branch
          %264 = sbr.rel (%p262) target = $region44
        $region43: #{tpu_custom_call.1} parent=31 // pred_region
          %265 = dma.done %s258, 32
        $region44: #{tpu_custom_call.1} parent=31 // pred_fallthru
          _
        %s266 = sand.u32 %s50, 1
        %s267 = scalar_lea.sflag [#allocation5], %s266
        %s268 = sand.u32 %s50, 1
        %s269 = smul.addr %s268, 256
        %s270 = scalar_lea.vmem [#allocation4], %s269
        %p271 = pneg %p63
        %p272 = pneg %p60
        %s273 = sand.u32 %s28, 1
        %s274 = scalar_lea.sflag [#allocation8], %s273
        %s275 = sand.u32 %s78, 1
        %s276 = smul.addr %s275, 256
        %s277 = scalar_lea.vmem [#allocation7], %s276
        %p278 = pneg %p91
        %p279 = pneg %p88
        %s280 = sand.u32 %s28, 1
        %s281 = scalar_lea.sflag [#allocation8], %s280
        %s282 = sand.u32 %s106, 1
        %s283 = smul.addr %s282, 2
        %s284 = scalar_lea.vmem [#allocation9], %s283
        %p285 = pneg %p119
        %p286 = pneg %p116
        %p287 = pneg %p147
        %p288 = pneg %p144
        %s289 = sand.u32 %s134, 1
        %s290 = scalar_lea.sflag [#allocation6], %s289
        %s291 = sand.u32 %s134, 1
        %s292 = smul.addr %s291, 512
        %s293 = scalar_lea.vmem [#allocation10], %s292
        %s294 = smul.u32 32, %s33
        %s295 = sld [smem:[#allocation3 + %s32]]
        %s296 = sld [smem:[#allocation3 + %s32]]
        %s297 = smul.u32 32, %s33
        %v298 = vld [vmem:[%s243] sm:$0xff]
        %v299 = vld [vmem:[%s243 + $0x8] sm:$0xff]
        %v300 = vld [vmem:[%s243 + $0x10] sm:$0xff]
        %v301 = vld [vmem:[%s243 + $0x18] sm:$0xff]
        %v302 = vld [vmem:[%s243 + $0x20] sm:$0xff]
        %v303 = vld [vmem:[%s243 + $0x28] sm:$0xff]
        %v304 = vld [vmem:[%s243 + $0x30] sm:$0xff]
        %v305 = vld [vmem:[%s243 + $0x38] sm:$0xff]
        %v306 = vld [vmem:[%s243 + $0x40] sm:$0xff]
        %v307 = vld [vmem:[%s243 + $0x48] sm:$0xff]
        %v308 = vld [vmem:[%s243 + $0x50] sm:$0xff]
        %v309 = vld [vmem:[%s243 + $0x58] sm:$0xff]
        %v310 = vld [vmem:[%s243 + $0x60] sm:$0xff]
        %v311 = vld [vmem:[%s243 + $0x68] sm:$0xff]
        %v312 = vld [vmem:[%s243 + $0x70] sm:$0xff]
        %v313 = vld [vmem:[%s243 + $0x78] sm:$0xff]
        %v314 = vld [vmem:[%s243 + $0x80] sm:$0xff]
        %v315 = vld [vmem:[%s243 + $0x88] sm:$0xff]
        %v316 = vld [vmem:[%s243 + $0x90] sm:$0xff]
        %v317 = vld [vmem:[%s243 + $0x98] sm:$0xff]
        %v318 = vld [vmem:[%s243 + $0xa0] sm:$0xff]
        %v319 = vld [vmem:[%s243 + $0xa8] sm:$0xff]
        %v320 = vld [vmem:[%s243 + $0xb0] sm:$0xff]
        %v321 = vld [vmem:[%s243 + $0xb8] sm:$0xff]
        %v322 = vld [vmem:[%s243 + $0xc0] sm:$0xff]
        %v323 = vld [vmem:[%s243 + $0xc8] sm:$0xff]
        %v324 = vld [vmem:[%s243 + $0xd0] sm:$0xff]
        %v325 = vld [vmem:[%s243 + $0xd8] sm:$0xff]
        %v326 = vld [vmem:[%s243 + $0xe0] sm:$0xff]
        %v327 = vld [vmem:[%s243 + $0xe8] sm:$0xff]
        %v328 = vld [vmem:[%s243 + $0xf0] sm:$0xff]
        %v329 = vld [vmem:[%s243 + $0xf8] sm:$0xff]
        %v330 = vld [vmem:[%s252] sm:$0xff]
        %v331 = vld [vmem:[%s252 + $0x8] sm:$0xff]
        %v332 = vld [vmem:[%s252 + $0x10] sm:$0xff]
        %v333 = vld [vmem:[%s252 + $0x18] sm:$0xff]
        %v334 = vld [vmem:[%s252 + $0x20] sm:$0xff]
        %v335 = vld [vmem:[%s252 + $0x28] sm:$0xff]
        %v336 = vld [vmem:[%s252 + $0x30] sm:$0xff]
        %v337 = vld [vmem:[%s252 + $0x38] sm:$0xff]
        %v338 = vld [vmem:[%s252 + $0x40] sm:$0xff]
        %v339 = vld [vmem:[%s252 + $0x48] sm:$0xff]
        %v340 = vld [vmem:[%s252 + $0x50] sm:$0xff]
        %v341 = vld [vmem:[%s252 + $0x58] sm:$0xff]
        %v342 = vld [vmem:[%s252 + $0x60] sm:$0xff]
        %v343 = vld [vmem:[%s252 + $0x68] sm:$0xff]
        %v344 = vld [vmem:[%s252 + $0x70] sm:$0xff]
        %v345 = vld [vmem:[%s252 + $0x78] sm:$0xff]
        %v346 = vld [vmem:[%s252 + $0x80] sm:$0xff]
        %v347 = vld [vmem:[%s252 + $0x88] sm:$0xff]
        %v348 = vld [vmem:[%s252 + $0x90] sm:$0xff]
        %v349 = vld [vmem:[%s252 + $0x98] sm:$0xff]
        %v350 = vld [vmem:[%s252 + $0xa0] sm:$0xff]
        %v351 = vld [vmem:[%s252 + $0xa8] sm:$0xff]
        %v352 = vld [vmem:[%s252 + $0xb0] sm:$0xff]
        %v353 = vld [vmem:[%s252 + $0xb8] sm:$0xff]
        %v354 = vld [vmem:[%s252 + $0xc0] sm:$0xff]
        %v355 = vld [vmem:[%s252 + $0xc8] sm:$0xff]
        %v356 = vld [vmem:[%s252 + $0xd0] sm:$0xff]
        %v357 = vld [vmem:[%s252 + $0xd8] sm:$0xff]
        %v358 = vld [vmem:[%s252 + $0xe0] sm:$0xff]
        %v359 = vld [vmem:[%s252 + $0xe8] sm:$0xff]
        %v360 = vld [vmem:[%s252 + $0xf0] sm:$0xff]
        %v361 = vld [vmem:[%s252 + $0xf8] sm:$0xff]
        %v362 = vld [vmem:[%s261] sm:$0x3]
        %v364 = vlaneseq
        %v365 = vshrl.u32 %v364, 7
        %v366 = vsub.s32 0, %v365
        %v367 = vrot.slane %v362, %v366
        %v368 = vlaneseq
        %v369 = vshrl.u32 %v368, 7
        %v370 = vsub.s32 1, %v369
        %v371 = vrot.slane %v362, %v370
        %v406 = vunpack.c.l.b16 %v298
        %v407 = vunpack.c.h.b16 %v298
        %v408 = vunpack.c.l.b16 %v299
        %v409 = vunpack.c.h.b16 %v299
        %v410 = vunpack.c.l.b16 %v300
        %v411 = vunpack.c.h.b16 %v300
        %v412 = vunpack.c.l.b16 %v301
        %v413 = vunpack.c.h.b16 %v301
        %v414 = vunpack.c.l.b16 %v302
        %v415 = vunpack.c.h.b16 %v302
        %v416 = vunpack.c.l.b16 %v303
        %v417 = vunpack.c.h.b16 %v303
        %v418 = vunpack.c.l.b16 %v304
        %v419 = vunpack.c.h.b16 %v304
        %v420 = vunpack.c.l.b16 %v305
        %v421 = vunpack.c.h.b16 %v305
        %v422 = vunpack.c.l.b16 %v306
        %v423 = vunpack.c.h.b16 %v306
        %v424 = vunpack.c.l.b16 %v307
        %v425 = vunpack.c.h.b16 %v307
        %v426 = vunpack.c.l.b16 %v308
        %v427 = vunpack.c.h.b16 %v308
        %v428 = vunpack.c.l.b16 %v309
        %v429 = vunpack.c.h.b16 %v309
        %v430 = vunpack.c.l.b16 %v310
        %v431 = vunpack.c.h.b16 %v310
        %v432 = vunpack.c.l.b16 %v311
        %v433 = vunpack.c.h.b16 %v311
        %v434 = vunpack.c.l.b16 %v312
        %v435 = vunpack.c.h.b16 %v312
        %v436 = vunpack.c.l.b16 %v313
        %v437 = vunpack.c.h.b16 %v313
        %v438 = vunpack.c.l.b16 %v314
        %v439 = vunpack.c.h.b16 %v314
        %v440 = vunpack.c.l.b16 %v315
        %v441 = vunpack.c.h.b16 %v315
        %v442 = vunpack.c.l.b16 %v316
        %v443 = vunpack.c.h.b16 %v316
        %v444 = vunpack.c.l.b16 %v317
        %v445 = vunpack.c.h.b16 %v317
        %v446 = vunpack.c.l.b16 %v318
        %v447 = vunpack.c.h.b16 %v318
        %v448 = vunpack.c.l.b16 %v319
        %v449 = vunpack.c.h.b16 %v319
        %v450 = vunpack.c.l.b16 %v320
        %v451 = vunpack.c.h.b16 %v320
        %v452 = vunpack.c.l.b16 %v321
        %v453 = vunpack.c.h.b16 %v321
        %v454 = vunpack.c.l.b16 %v322
        %v455 = vunpack.c.h.b16 %v322
        %v456 = vunpack.c.l.b16 %v323
        %v457 = vunpack.c.h.b16 %v323
        %v458 = vunpack.c.l.b16 %v324
        %v459 = vunpack.c.h.b16 %v324
        %v460 = vunpack.c.l.b16 %v325
        %v461 = vunpack.c.h.b16 %v325
        %v462 = vunpack.c.l.b16 %v326
        %v463 = vunpack.c.h.b16 %v326
        %v464 = vunpack.c.l.b16 %v327
        %v465 = vunpack.c.h.b16 %v327
        %v466 = vunpack.c.l.b16 %v328
        %v467 = vunpack.c.h.b16 %v328
        %v468 = vunpack.c.l.b16 %v329
        %v469 = vunpack.c.h.b16 %v329
        %v470 = vpack.c.b16 %v408, %v406
        %v471 = vpack.c.b16 %v409, %v407
        %v472 = vpack.c.b16 %v412, %v410
        %v473 = vpack.c.b16 %v413, %v411
        %v474 = vpack.c.b16 %v416, %v414
        %v475 = vpack.c.b16 %v417, %v415
        %v476 = vpack.c.b16 %v420, %v418
        %v477 = vpack.c.b16 %v421, %v419
        %v478 = vpack.c.b16 %v424, %v422
        %v479 = vpack.c.b16 %v425, %v423
        %v480 = vpack.c.b16 %v428, %v426
        %v481 = vpack.c.b16 %v429, %v427
        %v482 = vpack.c.b16 %v432, %v430
        %v483 = vpack.c.b16 %v433, %v431
        %v484 = vpack.c.b16 %v436, %v434
        %v485 = vpack.c.b16 %v437, %v435
        %v486 = vpack.c.b16 %v440, %v438
        %v487 = vpack.c.b16 %v441, %v439
        %v488 = vpack.c.b16 %v444, %v442
        %v489 = vpack.c.b16 %v445, %v443
        %v490 = vpack.c.b16 %v448, %v446
        %v491 = vpack.c.b16 %v449, %v447
        %v492 = vpack.c.b16 %v452, %v450
        %v493 = vpack.c.b16 %v453, %v451
        %v494 = vpack.c.b16 %v456, %v454
        %v495 = vpack.c.b16 %v457, %v455
        %v496 = vpack.c.b16 %v460, %v458
        %v497 = vpack.c.b16 %v461, %v459
        %v498 = vpack.c.b16 %v464, %v462
        %v499 = vpack.c.b16 %v465, %v463
        %v500 = vpack.c.b16 %v468, %v466
        %v501 = vpack.c.b16 %v469, %v467
        %v566 = vunpack.c.l.b16 %v330
        %v567 = vunpack.c.h.b16 %v330
        %v568 = vunpack.c.l.b16 %v331
        %v569 = vunpack.c.h.b16 %v331
        %v570 = vunpack.c.l.b16 %v332
        %v571 = vunpack.c.h.b16 %v332
        %v572 = vunpack.c.l.b16 %v333
        %v573 = vunpack.c.h.b16 %v333
        %v574 = vunpack.c.l.b16 %v334
        %v575 = vunpack.c.h.b16 %v334
        %v576 = vunpack.c.l.b16 %v335
        %v577 = vunpack.c.h.b16 %v335
        %v578 = vunpack.c.l.b16 %v336
        %v579 = vunpack.c.h.b16 %v336
        %v580 = vunpack.c.l.b16 %v337
        %v581 = vunpack.c.h.b16 %v337
        %v582 = vunpack.c.l.b16 %v338
        %v583 = vunpack.c.h.b16 %v338
        %v584 = vunpack.c.l.b16 %v339
        %v585 = vunpack.c.h.b16 %v339
        %v586 = vunpack.c.l.b16 %v340
        %v587 = vunpack.c.h.b16 %v340
        %v588 = vunpack.c.l.b16 %v341
        %v589 = vunpack.c.h.b16 %v341
        %v590 = vunpack.c.l.b16 %v342
        %v591 = vunpack.c.h.b16 %v342
        %v592 = vunpack.c.l.b16 %v343
        %v593 = vunpack.c.h.b16 %v343
        %v594 = vunpack.c.l.b16 %v344
        %v595 = vunpack.c.h.b16 %v344
        %v596 = vunpack.c.l.b16 %v345
        %v597 = vunpack.c.h.b16 %v345
        %v598 = vunpack.c.l.b16 %v346
        %v599 = vunpack.c.h.b16 %v346
        %v600 = vunpack.c.l.b16 %v347
        %v601 = vunpack.c.h.b16 %v347
        %v602 = vunpack.c.l.b16 %v348
        %v603 = vunpack.c.h.b16 %v348
        %v604 = vunpack.c.l.b16 %v349
        %v605 = vunpack.c.h.b16 %v349
        %v606 = vunpack.c.l.b16 %v350
        %v607 = vunpack.c.h.b16 %v350
        %v608 = vunpack.c.l.b16 %v351
        %v609 = vunpack.c.h.b16 %v351
        %v610 = vunpack.c.l.b16 %v352
        %v611 = vunpack.c.h.b16 %v352
        %v612 = vunpack.c.l.b16 %v353
        %v613 = vunpack.c.h.b16 %v353
        %v614 = vunpack.c.l.b16 %v354
        %v615 = vunpack.c.h.b16 %v354
        %v616 = vunpack.c.l.b16 %v355
        %v617 = vunpack.c.h.b16 %v355
        %v618 = vunpack.c.l.b16 %v356
        %v619 = vunpack.c.h.b16 %v356
        %v620 = vunpack.c.l.b16 %v357
        %v621 = vunpack.c.h.b16 %v357
        %v622 = vunpack.c.l.b16 %v358
        %v623 = vunpack.c.h.b16 %v358
        %v624 = vunpack.c.l.b16 %v359
        %v625 = vunpack.c.h.b16 %v359
        %v626 = vunpack.c.l.b16 %v360
        %v627 = vunpack.c.h.b16 %v360
        %v628 = vunpack.c.l.b16 %v361
        %v629 = vunpack.c.h.b16 %v361
        %v630 = vpack.c.b16 %v568, %v566
        %v631 = vpack.c.b16 %v569, %v567
        %v632 = vpack.c.b16 %v572, %v570
        %v633 = vpack.c.b16 %v573, %v571
        %v634 = vpack.c.b16 %v576, %v574
        %v635 = vpack.c.b16 %v577, %v575
        %v636 = vpack.c.b16 %v580, %v578
        %v637 = vpack.c.b16 %v581, %v579
        %v638 = vpack.c.b16 %v584, %v582
        %v639 = vpack.c.b16 %v585, %v583
        %v640 = vpack.c.b16 %v588, %v586
        %v641 = vpack.c.b16 %v589, %v587
        %v642 = vpack.c.b16 %v592, %v590
        %v643 = vpack.c.b16 %v593, %v591
        %v644 = vpack.c.b16 %v596, %v594
        %v645 = vpack.c.b16 %v597, %v595
        %v646 = vpack.c.b16 %v600, %v598
        %v647 = vpack.c.b16 %v601, %v599
        %v648 = vpack.c.b16 %v604, %v602
        %v649 = vpack.c.b16 %v605, %v603
        %v650 = vpack.c.b16 %v608, %v606
        %v651 = vpack.c.b16 %v609, %v607
        %v652 = vpack.c.b16 %v612, %v610
        %v653 = vpack.c.b16 %v613, %v611
        %v654 = vpack.c.b16 %v616, %v614
        %v655 = vpack.c.b16 %v617, %v615
        %v656 = vpack.c.b16 %v620, %v618
        %v657 = vpack.c.b16 %v621, %v619
        %v658 = vpack.c.b16 %v624, %v622
        %v659 = vpack.c.b16 %v625, %v623
        %v660 = vpack.c.b16 %v628, %v626
        %v661 = vpack.c.b16 %v629, %v627
        %694 = vmatprep.subr.bf16.mxu0 %v631
        %695 = vmatpush1.bf16.msra.mxu0 %v630
        %696 = vmatprep.subr.bf16.mxu0 %v633
        %697 = vmatpush1.bf16.msra.mxu0 %v632
        %698 = vmatprep.subr.bf16.mxu0 %v635
        %699 = vmatpush1.bf16.msra.mxu0 %v634
        %700 = vmatprep.subr.bf16.mxu0 %v637
        %701 = vmatpush1.bf16.msra.mxu0 %v636
        %702 = vmatprep.subr.bf16.mxu0 %v639
        %703 = vmatpush1.bf16.msra.mxu0 %v638
        %704 = vmatprep.subr.bf16.mxu0 %v641
        %705 = vmatpush1.bf16.msra.mxu0 %v640
        %706 = vmatprep.subr.bf16.mxu0 %v643
        %707 = vmatpush1.bf16.msra.mxu0 %v642
        %708 = vmatprep.subr.bf16.mxu0 %v645
        %709 = vmatpush1.bf16.msra.mxu0 %v644
        %710 = vmatprep.subr.bf16.mxu0 %v647
        %711 = vmatpush1.bf16.msra.mxu0 %v646
        %712 = vmatprep.subr.bf16.mxu0 %v649
        %713 = vmatpush1.bf16.msra.mxu0 %v648
        %714 = vmatprep.subr.bf16.mxu0 %v651
        %715 = vmatpush1.bf16.msra.mxu0 %v650
        %716 = vmatprep.subr.bf16.mxu0 %v653
        %717 = vmatpush1.bf16.msra.mxu0 %v652
        %718 = vmatprep.subr.bf16.mxu0 %v655
        %719 = vmatpush1.bf16.msra.mxu0 %v654
        %720 = vmatprep.subr.bf16.mxu0 %v657
        %721 = vmatpush1.bf16.msra.mxu0 %v656
        %722 = vmatprep.subr.bf16.mxu0 %v659
        %723 = vmatpush1.bf16.msra.mxu0 %v658
        %724 = vmatprep.subr.bf16.mxu0 %v661
        %725 = vmatpush1.bf16.msra.mxu0 %v660
        %726 = vmatprep.mubr.bf16.mxu0 %v471
        %727 = vmatmul.mubr.bf16.gmra.mrb[0].mxu0 %v470
        %v728 = vpop.f32.mrb[0].mxu0
        %v729 = vadd.f32 %v367, %v728
        %v730 = vpop.f32.mrb[0].mxu0
        %v731 = vadd.f32 %v371, %v730
        %v732 = vpop.f32.mrb[0].mxu0
        %v733 = vadd.f32 %v367, %v732
        %v734 = vpop.f32.mrb[0].mxu0
        %v735 = vadd.f32 %v371, %v734
        %736 = vmatprep.mubr.bf16.mxu0 %v473
        %737 = vmatmul.mubr.bf16.gmra.mrb[0].mxu0 %v472
        %v738 = vpop.f32.mrb[0].mxu0
        %v739 = vadd.f32 %v367, %v738
        %v740 = vpop.f32.mrb[0].mxu0
        %v741 = vadd.f32 %v371, %v740
        %v742 = vpop.f32.mrb[0].mxu0
        %v743 = vadd.f32 %v367, %v742
        %v744 = vpop.f32.mrb[0].mxu0
        %v745 = vadd.f32 %v371, %v744
        %746 = vmatprep.mubr.bf16.mxu0 %v475
        %747 = vmatmul.mubr.bf16.gmra.mrb[0].mxu0 %v474
        %v748 = vpop.f32.mrb[0].mxu0
        %v749 = vadd.f32 %v367, %v748
        %v750 = vpop.f32.mrb[0].mxu0
        %v751 = vadd.f32 %v371, %v750
        %v752 = vpop.f32.mrb[0].mxu0
        %v753 = vadd.f32 %v367, %v752
        %v754 = vpop.f32.mrb[0].mxu0
        %v755 = vadd.f32 %v371, %v754
        %756 = vmatprep.mubr.bf16.mxu0 %v477
        %757 = vmatmul.mubr.bf16.gmra.mrb[0].mxu0 %v476
        %v758 = vpop.f32.mrb[0].mxu0
        %v759 = vadd.f32 %v367, %v758
        %v760 = vpop.f32.mrb[0].mxu0
        %v761 = vadd.f32 %v371, %v760
        %v762 = vpop.f32.mrb[0].mxu0
        %v763 = vadd.f32 %v367, %v762
        %v764 = vpop.f32.mrb[0].mxu0
        %v765 = vadd.f32 %v371, %v764
        %766 = vmatprep.mubr.bf16.mxu0 %v479
        %767 = vmatmul.mubr.bf16.gmra.mrb[0].mxu0 %v478
        %v768 = vpop.f32.mrb[0].mxu0
        %v769 = vadd.f32 %v367, %v768
        %v770 = vpop.f32.mrb[0].mxu0
        %v771 = vadd.f32 %v371, %v770
        %v772 = vpop.f32.mrb[0].mxu0
        %v773 = vadd.f32 %v367, %v772
        %v774 = vpop.f32.mrb[0].mxu0
        %v775 = vadd.f32 %v371, %v774
        %776 = vmatprep.mubr.bf16.mxu0 %v481
        %777 = vmatmul.mubr.bf16.gmra.mrb[0].mxu0 %v480
        %v778 = vpop.f32.mrb[0].mxu0
        %v779 = vadd.f32 %v367, %v778
        %v780 = vpop.f32.mrb[0].mxu0
        %v781 = vadd.f32 %v371, %v780
        %v782 = vpop.f32.mrb[0].mxu0
        %v783 = vadd.f32 %v367, %v782
        %v784 = vpop.f32.mrb[0].mxu0
        %v785 = vadd.f32 %v371, %v784
        %786 = vmatprep.mubr.bf16.mxu0 %v483
        %787 = vmatmul.mubr.bf16.gmra.mrb[0].mxu0 %v482
        %v788 = vpop.f32.mrb[0].mxu0
        %v789 = vadd.f32 %v367, %v788
        %v790 = vpop.f32.mrb[0].mxu0
        %v791 = vadd.f32 %v371, %v790
        %v792 = vpop.f32.mrb[0].mxu0
        %v793 = vadd.f32 %v367, %v792
        %v794 = vpop.f32.mrb[0].mxu0
        %v795 = vadd.f32 %v371, %v794
        %796 = vmatprep.mubr.bf16.mxu0 %v485
        %797 = vmatmul.mubr.bf16.gmra.mrb[0].mxu0 %v484
        %v798 = vpop.f32.mrb[0].mxu0
        %v799 = vadd.f32 %v367, %v798
        %v800 = vpop.f32.mrb[0].mxu0
        %v801 = vadd.f32 %v371, %v800
        %v802 = vpop.f32.mrb[0].mxu0
        %v803 = vadd.f32 %v367, %v802
        %v804 = vpop.f32.mrb[0].mxu0
        %v805 = vadd.f32 %v371, %v804
        %806 = vmatprep.mubr.bf16.mxu0 %v487
        %807 = vmatmul.mubr.bf16.gmra.mrb[0].mxu0 %v486
        %v808 = vpop.f32.mrb[0].mxu0
        %v809 = vadd.f32 %v367, %v808
        %v810 = vpop.f32.mrb[0].mxu0
        %v811 = vadd.f32 %v371, %v810
        %v812 = vpop.f32.mrb[0].mxu0
        %v813 = vadd.f32 %v367, %v812
        %v814 = vpop.f32.mrb[0].mxu0
        %v815 = vadd.f32 %v371, %v814
        %816 = vmatprep.mubr.bf16.mxu0 %v489
        %817 = vmatmul.mubr.bf16.gmra.mrb[0].mxu0 %v488
        %v818 = vpop.f32.mrb[0].mxu0
        %v819 = vadd.f32 %v367, %v818
        %v820 = vpop.f32.mrb[0].mxu0
        %v821 = vadd.f32 %v371, %v820
        %v822 = vpop.f32.mrb[0].mxu0
        %v823 = vadd.f32 %v367, %v822
        %v824 = vpop.f32.mrb[0].mxu0
        %v825 = vadd.f32 %v371, %v824
        %826 = vmatprep.mubr.bf16.mxu0 %v491
        %827 = vmatmul.mubr.bf16.gmra.mrb[0].mxu0 %v490
        %v828 = vpop.f32.mrb[0].mxu0
        %v829 = vadd.f32 %v367, %v828
        %v830 = vpop.f32.mrb[0].mxu0
        %v831 = vadd.f32 %v371, %v830
        %v832 = vpop.f32.mrb[0].mxu0
        %v833 = vadd.f32 %v367, %v832
        %v834 = vpop.f32.mrb[0].mxu0
        %v835 = vadd.f32 %v371, %v834
        %836 = vmatprep.mubr.bf16.mxu0 %v493
        %837 = vmatmul.mubr.bf16.gmra.mrb[0].mxu0 %v492
        %v838 = vpop.f32.mrb[0].mxu0
        %v839 = vadd.f32 %v367, %v838
        %v840 = vpop.f32.mrb[0].mxu0
        %v841 = vadd.f32 %v371, %v840
        %v842 = vpop.f32.mrb[0].mxu0
        %v843 = vadd.f32 %v367, %v842
        %v844 = vpop.f32.mrb[0].mxu0
        %v845 = vadd.f32 %v371, %v844
        %846 = vmatprep.mubr.bf16.mxu0 %v495
        %847 = vmatmul.mubr.bf16.gmra.mrb[0].mxu0 %v494
        %v848 = vpop.f32.mrb[0].mxu0
        %v849 = vadd.f32 %v367, %v848
        %v850 = vpop.f32.mrb[0].mxu0
        %v851 = vadd.f32 %v371, %v850
        %v852 = vpop.f32.mrb[0].mxu0
        %v853 = vadd.f32 %v367, %v852
        %v854 = vpop.f32.mrb[0].mxu0
        %v855 = vadd.f32 %v371, %v854
        %856 = vmatprep.mubr.bf16.mxu0 %v497
        %857 = vmatmul.mubr.bf16.gmra.mrb[0].mxu0 %v496
        %v858 = vpop.f32.mrb[0].mxu0
        %v859 = vadd.f32 %v367, %v858
        %v860 = vpop.f32.mrb[0].mxu0
        %v861 = vadd.f32 %v371, %v860
        %v862 = vpop.f32.mrb[0].mxu0
        %v863 = vadd.f32 %v367, %v862
        %v864 = vpop.f32.mrb[0].mxu0
        %v865 = vadd.f32 %v371, %v864
        %866 = vmatprep.mubr.bf16.mxu0 %v499
        %867 = vmatmul.mubr.bf16.gmra.mrb[0].mxu0 %v498
        %v868 = vpop.f32.mrb[0].mxu0
        %v869 = vadd.f32 %v367, %v868
        %v870 = vpop.f32.mrb[0].mxu0
        %v871 = vadd.f32 %v371, %v870
        %v872 = vpop.f32.mrb[0].mxu0
        %v873 = vadd.f32 %v367, %v872
        %v874 = vpop.f32.mrb[0].mxu0
        %v875 = vadd.f32 %v371, %v874
        %876 = vmatprep.mubr.bf16.mxu0 %v501
        %877 = vmatmul.mubr.bf16.gmra.mrb[0].mxu0 %v500
        %v878 = vpop.f32.mrb[0].mxu0
        %v879 = vadd.f32 %v367, %v878
        %v880 = vpop.f32.mrb[0].mxu0
        %v881 = vadd.f32 %v371, %v880
        %v882 = vpop.f32.mrb[0].mxu0
        %v883 = vadd.f32 %v367, %v882
        %v884 = vpop.f32.mrb[0].mxu0
        %v885 = vadd.f32 %v371, %v884
        %886 = vdwg.mxu0
        %887 = vst [vmem:[%s293] sm:$0xff] %v729
        %888 = vst [vmem:[%s293 + $0x8] sm:$0xff] %v731
        %889 = vst [vmem:[%s293 + $0x10] sm:$0xff] %v733
        %890 = vst [vmem:[%s293 + $0x18] sm:$0xff] %v735
        %891 = vst [vmem:[%s293 + $0x20] sm:$0xff] %v739
        %892 = vst [vmem:[%s293 + $0x28] sm:$0xff] %v741
        %893 = vst [vmem:[%s293 + $0x30] sm:$0xff] %v743
        %894 = vst [vmem:[%s293 + $0x38] sm:$0xff] %v745
        %895 = vst [vmem:[%s293 + $0x40] sm:$0xff] %v749
        %896 = vst [vmem:[%s293 + $0x48] sm:$0xff] %v751
        %897 = vst [vmem:[%s293 + $0x50] sm:$0xff] %v753
        %898 = vst [vmem:[%s293 + $0x58] sm:$0xff] %v755
        %899 = vst [vmem:[%s293 + $0x60] sm:$0xff] %v759
        %900 = vst [vmem:[%s293 + $0x68] sm:$0xff] %v761
        %901 = vst [vmem:[%s293 + $0x70] sm:$0xff] %v763
        %902 = vst [vmem:[%s293 + $0x78] sm:$0xff] %v765
        %903 = vst [vmem:[%s293 + $0x80] sm:$0xff] %v769
        %904 = vst [vmem:[%s293 + $0x88] sm:$0xff] %v771
        %905 = vst [vmem:[%s293 + $0x90] sm:$0xff] %v773
        %906 = vst [vmem:[%s293 + $0x98] sm:$0xff] %v775
        %907 = vst [vmem:[%s293 + $0xa0] sm:$0xff] %v779
        %908 = vst [vmem:[%s293 + $0xa8] sm:$0xff] %v781
        %909 = vst [vmem:[%s293 + $0xb0] sm:$0xff] %v783
        %910 = vst [vmem:[%s293 + $0xb8] sm:$0xff] %v785
        %911 = vst [vmem:[%s293 + $0xc0] sm:$0xff] %v789
        %912 = vst [vmem:[%s293 + $0xc8] sm:$0xff] %v791
        %913 = vst [vmem:[%s293 + $0xd0] sm:$0xff] %v793
        %914 = vst [vmem:[%s293 + $0xd8] sm:$0xff] %v795
        %915 = vst [vmem:[%s293 + $0xe0] sm:$0xff] %v799
        %916 = vst [vmem:[%s293 + $0xe8] sm:$0xff] %v801
        %917 = vst [vmem:[%s293 + $0xf0] sm:$0xff] %v803
        %918 = vst [vmem:[%s293 + $0xf8] sm:$0xff] %v805
        %919 = vst [vmem:[%s293 + $0x100] sm:$0xff] %v809
        %920 = vst [vmem:[%s293 + $0x108] sm:$0xff] %v811
        %921 = vst [vmem:[%s293 + $0x110] sm:$0xff] %v813
        %922 = vst [vmem:[%s293 + $0x118] sm:$0xff] %v815
        %923 = vst [vmem:[%s293 + $0x120] sm:$0xff] %v819
        %924 = vst [vmem:[%s293 + $0x128] sm:$0xff] %v821
        %925 = vst [vmem:[%s293 + $0x130] sm:$0xff] %v823
        %926 = vst [vmem:[%s293 + $0x138] sm:$0xff] %v825
        %927 = vst [vmem:[%s293 + $0x140] sm:$0xff] %v829
        %928 = vst [vmem:[%s293 + $0x148] sm:$0xff] %v831
        %929 = vst [vmem:[%s293 + $0x150] sm:$0xff] %v833
        %930 = vst [vmem:[%s293 + $0x158] sm:$0xff] %v835
        %931 = vst [vmem:[%s293 + $0x160] sm:$0xff] %v839
        %932 = vst [vmem:[%s293 + $0x168] sm:$0xff] %v841
        %933 = vst [vmem:[%s293 + $0x170] sm:$0xff] %v843
        %934 = vst [vmem:[%s293 + $0x178] sm:$0xff] %v845
        %935 = vst [vmem:[%s293 + $0x180] sm:$0xff] %v849
        %936 = vst [vmem:[%s293 + $0x188] sm:$0xff] %v851
        %937 = vst [vmem:[%s293 + $0x190] sm:$0xff] %v853
        %938 = vst [vmem:[%s293 + $0x198] sm:$0xff] %v855
        %939 = vst [vmem:[%s293 + $0x1a0] sm:$0xff] %v859
        %940 = vst [vmem:[%s293 + $0x1a8] sm:$0xff] %v861
        %941 = vst [vmem:[%s293 + $0x1b0] sm:$0xff] %v863
        %942 = vst [vmem:[%s293 + $0x1b8] sm:$0xff] %v865
        %943 = vst [vmem:[%s293 + $0x1c0] sm:$0xff] %v869
        %944 = vst [vmem:[%s293 + $0x1c8] sm:$0xff] %v871
        %945 = vst [vmem:[%s293 + $0x1d0] sm:$0xff] %v873
        %946 = vst [vmem:[%s293 + $0x1d8] sm:$0xff] %v875
        %947 = vst [vmem:[%s293 + $0x1e0] sm:$0xff] %v879
        %948 = vst [vmem:[%s293 + $0x1e8] sm:$0xff] %v881
        %949 = vst [vmem:[%s293 + $0x1f0] sm:$0xff] %v883
        %950 = vst [vmem:[%s293 + $0x1f8] sm:$0xff] %v885
        %s951 = sand.u32 %s134, 1
        %s952 = scalar_lea.sflag [#allocation6], %s951
        %s953 = sand.u32 %s134, 1
        %s954 = smul.addr %s953, 512
        %s955 = scalar_lea.vmem [#allocation10], %s954
        // Predicated region
        $region45: #{tpu_custom_call.1} parent=31 // pred_check
          %p956 = pneg %p144
        $region46: #{tpu_custom_call.1} parent=31 // pred_check_branch
          %958 = sbr.rel (%p956) target = $region48
        $region47: #{tpu_custom_call.1} parent=31 // pred_region
          %s959 = smul.u32 32, %s33
          %s961 = ssub.s32 8192, 8192
          %962 = vsyncadd %s952, %s961
          %s963 = smul.addr %s959, 2
          %s964 = smul.addr %s32, 128
          %s965 = sadd.s32 %s963, %s964
          %s966 = smul.addr %s965, 128
          %s967 = scalar_lea.hbm %s4, %s966
          %s968 = sshll.u32 %s955, 4
          %s969 = int_to_ptr.vmem [resolvable:$true] %s968
          %974 = dma.vmem_to_hbm [thread:$0]  %s969, 8192, %s967, %s952, 256, 256, 16
        $region48: #{tpu_custom_call.1} parent=31 // pred_fallthru
          _
      $region32: #{tpu_custom_call.1} parent=5 // pred_fallthru
        _
      %p975 = scmp.le.s32.totalorder 2, %s23
      // Predicated region
      $region49: #{tpu_custom_call.1} parent=5 // pred_check
        %p976 = pneg %p975
      $region50: #{tpu_custom_call.1} parent=5 // pred_check_branch
        %978 = sbr.rel (%p976) target = $region52
      $region51: #{tpu_custom_call.1} parent=5 // pred_region
        %s979 = ssub.s32 %s23, 2
        // Predicated region
        $region53: #{tpu_custom_call.1} parent=51 // pred_check
          %p980 = pneg %p150
        $region54: #{tpu_custom_call.1} parent=51 // pred_check_branch
          %982 = sbr.rel (%p980) target = $region56
        $region55: #{tpu_custom_call.1} parent=51 // pred_region
          %s983 = sand.u32 %s135, 1
          %s984 = scalar_lea.sflag [#allocation6], %s983
          %s985 = sand.u32 %s135, 1
          %s986 = smul.addr %s985, 512
          %s987 = scalar_lea.vmem [#allocation10], %s986
          %988 = dma.done %s984, 8192
        $region56: #{tpu_custom_call.1} parent=51 // pred_fallthru
          _
      $region52: #{tpu_custom_call.1} parent=5 // pred_fallthru
        _
    $region6: #{tpu_custom_call.1} parent=1 // loop_footer
      %s27 = sadd.s32 1, %s23
    $region7: #{tpu_custom_call.1} parent=1 // loop_footer_branch
      %22 = sbr.rel target = $region3
    $region8: #{tpu_custom_call.1} parent=1 // loop_exit
      _
    %989 = vsyncpa [#allocation5], 1
    %s990 = scalar_lea.sflag [#allocation5], 1
    %991 = vsyncpa %s990, 1
    %992 = vsyncpa [#allocation8], 1
    %s993 = scalar_lea.sflag [#allocation8], 1
    %994 = vsyncpa %s993, 1
    %995 = vsyncpa [#allocation6], 1
    %s996 = scalar_lea.sflag [#allocation6], 1
    %997 = vsyncpa %s996, 1

</llo_original>
